<compile_context>
chip_gen: v7x
topology: tpu7x:2x2x1
jax: 0.10.0
libtpu: 0.0.40
codegen_flags: <defaults>
</compile_context>

<pallas_src>
import functools

import jax
import jax.numpy as jnp
from jax.experimental import pallas as pl
from jax.experimental.pallas import tpu as pltpu


def _conv_block_kernel(xs_ref, w_ref, mask_ref, o_ref, *,
                       k, stride, cin, wb, wo, eps, neg_slope, norm):
    # xs_ref  : (1, s*s*Cin, LB) bf16  space-to-depth input (resident per batch)
    # w_ref   : (tc, k*k*Cin)    bf16  weight tile, columns grouped by tap (i, j)
    # mask_ref: (1, LO)          f32   1.0 on valid output columns, 0.0 on pad
    # o_ref   : (1, tc, LO)      bf16
    s = stride
    lo = o_ref.shape[-1]

    # Fused im2col: conv = k*k accumulating MXU matmuls over static lane-window
    # slices of the resident input block (no patches array ever hits HBM).
    acc = None
    for i in range(k):
        for j in range(k):
            g = (i % s) * s + (j % s)            # space-to-depth subgrid index
            delta = (i // s) * wb + (j // s)     # static flat shift of this tap
            slab = xs_ref[0, g * cin:(g + 1) * cin, delta:delta + lo]  # (Cin, LO)
            t = i * k + j
            w_tap = w_ref[:, t * cin:(t + 1) * cin]                    # (tc, Cin)
            part = jnp.dot(w_tap, slab, preferred_element_type=jnp.float32)
            acc = part if acc is None else acc + part                  # (tc, LO) f32

    if norm:
        # Exact per-(sample, channel) InstanceNorm stats from the f32 accumulator
        # in a single pass; padded flat-layout columns are masked out of the sums.
        vm = mask_ref[...]                                             # (1, LO)
        ho = lo // wb
        inv_cnt = 1.0 / float(ho * wo)
        ssum = jnp.sum(acc * vm, axis=-1, keepdims=True)
        ssq = jnp.sum(acc * acc * vm, axis=-1, keepdims=True)
        mean = ssum * inv_cnt
        var = jnp.maximum(ssq * inv_cnt - mean * mean, 0.0)
        z = (acc - mean) * jax.lax.rsqrt(var + eps)
    else:
        z = acc

    # LeakyReLU(0.2) as a single VPU max (slope in (0, 1)).
    o_ref[0] = jnp.maximum(z, neg_slope * z).astype(o_ref.dtype)


def _choose_cout_tile(cout, cin, k, s, lb, lo, budget_bytes=40 * 1024 * 1024):
    """Largest Cout tile (<=256, divides Cout, multiple of 8 or full) fitting budget."""
    def footprint(tc):
        xs_b = 2 * (s * s * cin) * lb * 2      # double-buffered bf16 input block
        w_b = 2 * tc * (k * k * cin) * 2       # double-buffered bf16 weight tile
        out_b = 2 * tc * lo * 2                # double-buffered bf16 output tile
        acc_b = tc * lo * 4                    # in-flight f32 accumulator
        slab_b = 4 * cin * lo * 2              # a few live bf16 tap slabs
        msk_b = 2 * lo * 4
        return xs_b + w_b + out_b + acc_b + slab_b + msk_b

    cands = [cout] + [t for t in range(8, cout, 8) if cout % t == 0]
    fits = [t for t in cands if t <= 256 and footprint(t) <= budget_bytes]
    tc = max(fits) if fits else min(cands)
    return tc, footprint(tc)


def conv_block_forward(x, weight, stride, norm=True, eps=1e-5, neg_slope=0.2):
    """x: (N, Cin, H, W) NCHW; weight: (Cout, Cin, 4, 4) PyTorch OIHW (no bias)."""
    N, Cin, H, W = x.shape
    Cout, Cin_w, kh, kw = weight.shape
    assert Cin == Cin_w and kh == kw == 4
    k, s, pad = 4, int(stride), 1
    kk = -(-k // s)                              # taps per axis per stride residue

    Hp, Wp = H + 2 * pad, W + 2 * pad
    Ho = (Hp - k) // s + 1
    Wo = (Wp - k) // s + 1
    Ha, Wb = Ho + kk, Wo + kk - 1                # subgrid extents (+1 row of slack)
    LB, LO = Ha * Wb, Ho * Wb                    # flat lengths (input / output)

    # Zero-amplification space-to-depth of the padded input:
    #   xs[n, (p*s+q)*Cin + c, a*Wb + b] = xpad[n, c, s*a + p, s*b + q]
    # Tap (i, j) of output flat index m is then xs[n, g*Cin + c, m + (i//s)*Wb + j//s]
    # with g = (i%s)*s + (j%s): a purely static, contiguous lane-window slice.
    xp = jnp.pad(x, ((0, 0), (0, 0),
                     (pad, s * Ha - H - pad), (pad, s * Wb - W - pad)))
    xs = (xp.reshape(N, Cin, Ha, s, Wb, s)
            .transpose(0, 3, 5, 1, 2, 4)
            .reshape(N, s * s * Cin, LB)
            .astype(jnp.bfloat16))

    # Weight (Cout, Cin, 4, 4) -> (Cout, k*k*Cin), columns grouped by tap (i, j).
    wmat = (weight.transpose(0, 2, 3, 1)
                  .reshape(Cout, k * k * Cin)
                  .astype(jnp.bfloat16))

    # 1.0 on valid output columns (ow < Wo), 0.0 on the Wb-Wo flat-layout pad.
    mask = ((jnp.arange(LO) % Wb) < Wo).astype(jnp.float32).reshape(1, LO)

    tc, vmem_est = _choose_cout_tile(Cout, Cin, k, s, LB, LO)
    vmem_limit = int(min(56 * 1024 * 1024,
                         max(32 * 1024 * 1024, 3 * vmem_est // 2)))
    grid = (N, Cout // tc)

    kernel = functools.partial(_conv_block_kernel, k=k, stride=s, cin=Cin,
                               wb=Wb, wo=Wo, eps=eps, neg_slope=neg_slope,
                               norm=norm)

    out = pl.pallas_call(
        kernel,
        out_shape=jax.ShapeDtypeStruct((N, Cout, LO), jnp.bfloat16),
        grid_spec=pltpu.PrefetchScalarGridSpec(
            num_scalar_prefetch=0,
            grid=grid,
            in_specs=[
                # input block is constant along the Cout-tile axis -> fetched once
                # per batch and kept resident in VMEM.
                pl.BlockSpec((1, s * s * Cin, LB), lambda n, ci: (n, 0, 0)),
                pl.BlockSpec((tc, k * k * Cin), lambda n, ci: (ci, 0)),
                pl.BlockSpec((1, LO), lambda n, ci: (0, 0)),
            ],
            out_specs=pl.BlockSpec((1, tc, LO), lambda n, ci: (n, ci, 0)),
        ),
        compiler_params=pltpu.CompilerParams(
            dimension_semantics=("parallel", "parallel"),
            vmem_limit_bytes=vmem_limit),
    )(xs, wmat, mask)

    # (N, Cout, Ho*Wb) -> crop the flat-layout pad columns -> (N, Cout, Ho, Wo).
    out = out.reshape(N, Cout, Ho, Wb)[:, :, :, :Wo]
    return out.astype(x.dtype)


def _reference(x, weight, stride, norm=True, eps=1e-5, neg_slope=0.2):
    y = jax.lax.conv_general_dilated(
        x, weight, window_strides=(stride, stride),
        padding=((1, 1), (1, 1)),
        dimension_numbers=("NCHW", "OIHW", "NCHW"),
        precision=jax.lax.Precision.HIGHEST)
    if norm:
        mean = y.mean(axis=(2, 3), keepdims=True)
        var = ((y - mean) ** 2).mean(axis=(2, 3), keepdims=True)
        y = (y - mean) / jnp.sqrt(var + eps)
    return jnp.where(y >= 0, y, neg_slope * y)


if __name__ == "__main__":
    key = jax.random.PRNGKey(0)
    kx, kw_key = jax.random.split(key)

    # ConvBlock(in_channels=4, out_channels=8, stride=2, norm=True)
    N, Cin, H, W = 2, 4, 16, 16
    Cout, stride = 8, 2

    x = jax.random.normal(kx, (N, Cin, H, W), dtype=jnp.float32)
    fan_in = Cin * 4 * 4
    weight = jax.random.uniform(kw_key, (Cout, Cin, 4, 4), dtype=jnp.float32,
                                minval=-1.0, maxval=1.0) / jnp.sqrt(fan_in)

    fwd = jax.jit(conv_block_forward, static_argnums=(2, 3))
    out = jax.block_until_ready(fwd(x, weight, stride, True))

    ref = _reference(x, weight, stride, norm=True)
    assert out.shape == ref.shape == (N, Cout, 8, 8)
    # bf16 MXU inputs + bf16 kernel output vs the f32 HIGHEST reference.
    assert jnp.allclose(out, ref, rtol=5e-2, atol=5e-2), "mismatch vs reference"

    print("KERNEL_OK")
</pallas_src>

<mosaic_0001>
module attributes {stable_mosaic.version = 11 : i64} {
  func.func @_conv_block_kernel(%arg0: i32, %arg1: i32, %arg2: memref<1x16x90xbf16, #tpu.memory_space<vmem>>, %arg3: memref<8x64xbf16, #tpu.memory_space<vmem>>, %arg4: memref<1x72xf32, #tpu.memory_space<vmem>>, %arg5: memref<1x8x72xbf16, #tpu.memory_space<vmem>>) attributes {dimension_semantics = [#tpu.dimension_semantics<parallel>, #tpu.dimension_semantics<parallel>], iteration_bounds = array<i64: 2, 1>, scalar_prefetch = 0 : i64, scratch_operands = 0 : i64, tpu.core_type = #tpu.core_type<tc>, window_params = [{transform_indices = @transform_0, window_bounds = array<i64: 1, 16, 90>}, {transform_indices = @transform_1, window_bounds = array<i64: 8, 64>}, {pipeline_mode = #tpu.pipeline_mode<synchronous>, transform_indices = @transform_2, window_bounds = array<i64: 1, 72>}, {transform_indices = @transform_3, window_bounds = array<i64: 1, 8, 72>}]} {
    %c0 = arith.constant 0 : index
    %c0_0 = arith.constant 0 : index
    %c0_1 = arith.constant 0 : index
    %0 = vector.load %arg2[%c0, %c0_0, %c0_1] : memref<1x16x90xbf16, #tpu.memory_space<vmem>>, vector<1x4x72xbf16>
    %1 = vector.shape_cast %0 : vector<1x4x72xbf16> to vector<4x72xbf16>
    %c0_2 = arith.constant 0 : index
    %c0_3 = arith.constant 0 : index
    %2 = vector.load %arg3[%c0_2, %c0_3] : memref<8x64xbf16, #tpu.memory_space<vmem>>, vector<8x4xbf16>
    %cst = arith.constant dense<0.000000e+00> : vector<8x72xf32>
    %3 = tpu.matmul %2, %1, %cst {dimension_numbers = #tpu.dot_dimension_numbers<[1], [0], [0], [1], [0, 0, 1, 1], [], []>} : vector<8x4xbf16>, vector<4x72xbf16>, vector<8x72xf32> -> vector<8x72xf32>
    %c0_4 = arith.constant 0 : index
    %c4 = arith.constant 4 : index
    %c0_5 = arith.constant 0 : index
    %4 = vector.load %arg2[%c0_4, %c4, %c0_5] : memref<1x16x90xbf16, #tpu.memory_space<vmem>>, vector<1x4x72xbf16>
    %5 = vector.shape_cast %4 : vector<1x4x72xbf16> to vector<4x72xbf16>
    %c0_6 = arith.constant 0 : index
    %c4_7 = arith.constant 4 : index
    %6 = vector.load %arg3[%c0_6, %c4_7] : memref<8x64xbf16, #tpu.memory_space<vmem>>, vector<8x4xbf16>
    %cst_8 = arith.constant dense<0.000000e+00> : vector<8x72xf32>
    %7 = tpu.matmul %6, %5, %cst_8 {dimension_numbers = #tpu.dot_dimension_numbers<[1], [0], [0], [1], [0, 0, 1, 1], [], []>} : vector<8x4xbf16>, vector<4x72xbf16>, vector<8x72xf32> -> vector<8x72xf32>
    %8 = arith.addf %3, %7 : vector<8x72xf32>
    %c0_9 = arith.constant 0 : index
    %c0_10 = arith.constant 0 : index
    %c1 = arith.constant 1 : index
    %9 = vector.load %arg2[%c0_9, %c0_10, %c1] : memref<1x16x90xbf16, #tpu.memory_space<vmem>>, vector<1x4x72xbf16>
    %10 = vector.shape_cast %9 : vector<1x4x72xbf16> to vector<4x72xbf16>
    %c0_11 = arith.constant 0 : index
    %c8 = arith.constant 8 : index
    %11 = vector.load %arg3[%c0_11, %c8] : memref<8x64xbf16, #tpu.memory_space<vmem>>, vector<8x4xbf16>
    %cst_12 = arith.constant dense<0.000000e+00> : vector<8x72xf32>
    %12 = tpu.matmul %11, %10, %cst_12 {dimension_numbers = #tpu.dot_dimension_numbers<[1], [0], [0], [1], [0, 0, 1, 1], [], []>} : vector<8x4xbf16>, vector<4x72xbf16>, vector<8x72xf32> -> vector<8x72xf32>
    %13 = arith.addf %8, %12 : vector<8x72xf32>
    %c0_13 = arith.constant 0 : index
    %c4_14 = arith.constant 4 : index
    %c1_15 = arith.constant 1 : index
    %14 = vector.load %arg2[%c0_13, %c4_14, %c1_15] : memref<1x16x90xbf16, #tpu.memory_space<vmem>>, vector<1x4x72xbf16>
    %15 = vector.shape_cast %14 : vector<1x4x72xbf16> to vector<4x72xbf16>
    %c0_16 = arith.constant 0 : index
    %c12 = arith.constant 12 : index
    %16 = vector.load %arg3[%c0_16, %c12] : memref<8x64xbf16, #tpu.memory_space<vmem>>, vector<8x4xbf16>
    %cst_17 = arith.constant dense<0.000000e+00> : vector<8x72xf32>
    %17 = tpu.matmul %16, %15, %cst_17 {dimension_numbers = #tpu.dot_dimension_numbers<[1], [0], [0], [1], [0, 0, 1, 1], [], []>} : vector<8x4xbf16>, vector<4x72xbf16>, vector<8x72xf32> -> vector<8x72xf32>
    %18 = arith.addf %13, %17 : vector<8x72xf32>
    %c0_18 = arith.constant 0 : index
    %c8_19 = arith.constant 8 : index
    %c0_20 = arith.constant 0 : index
    %19 = vector.load %arg2[%c0_18, %c8_19, %c0_20] : memref<1x16x90xbf16, #tpu.memory_space<vmem>>, vector<1x4x72xbf16>
    %20 = vector.shape_cast %19 : vector<1x4x72xbf16> to vector<4x72xbf16>
    %c0_21 = arith.constant 0 : index
    %c16 = arith.constant 16 : index
    %21 = vector.load %arg3[%c0_21, %c16] : memref<8x64xbf16, #tpu.memory_space<vmem>>, vector<8x4xbf16>
    %cst_22 = arith.constant dense<0.000000e+00> : vector<8x72xf32>
    %22 = tpu.matmul %21, %20, %cst_22 {dimension_numbers = #tpu.dot_dimension_numbers<[1], [0], [0], [1], [0, 0, 1, 1], [], []>} : vector<8x4xbf16>, vector<4x72xbf16>, vector<8x72xf32> -> vector<8x72xf32>
    %23 = arith.addf %18, %22 : vector<8x72xf32>
    %c0_23 = arith.constant 0 : index
    %c12_24 = arith.constant 12 : index
    %c0_25 = arith.constant 0 : index
    %24 = vector.load %arg2[%c0_23, %c12_24, %c0_25] : memref<1x16x90xbf16, #tpu.memory_space<vmem>>, vector<1x4x72xbf16>
    %25 = vector.shape_cast %24 : vector<1x4x72xbf16> to vector<4x72xbf16>
    %c0_26 = arith.constant 0 : index
    %c20 = arith.constant 20 : index
    %26 = vector.load %arg3[%c0_26, %c20] : memref<8x64xbf16, #tpu.memory_space<vmem>>, vector<8x4xbf16>
    %cst_27 = arith.constant dense<0.000000e+00> : vector<8x72xf32>
    %27 = tpu.matmul %26, %25, %cst_27 {dimension_numbers = #tpu.dot_dimension_numbers<[1], [0], [0], [1], [0, 0, 1, 1], [], []>} : vector<8x4xbf16>, vector<4x72xbf16>, vector<8x72xf32> -> vector<8x72xf32>
    %28 = arith.addf %23, %27 : vector<8x72xf32>
    %c0_28 = arith.constant 0 : index
    %c8_29 = arith.constant 8 : index
    %c1_30 = arith.constant 1 : index
    %29 = vector.load %arg2[%c0_28, %c8_29, %c1_30] : memref<1x16x90xbf16, #tpu.memory_space<vmem>>, vector<1x4x72xbf16>
    %30 = vector.shape_cast %29 : vector<1x4x72xbf16> to vector<4x72xbf16>
    %c0_31 = arith.constant 0 : index
    %c24 = arith.constant 24 : index
    %31 = vector.load %arg3[%c0_31, %c24] : memref<8x64xbf16, #tpu.memory_space<vmem>>, vector<8x4xbf16>
    %cst_32 = arith.constant dense<0.000000e+00> : vector<8x72xf32>
    %32 = tpu.matmul %31, %30, %cst_32 {dimension_numbers = #tpu.dot_dimension_numbers<[1], [0], [0], [1], [0, 0, 1, 1], [], []>} : vector<8x4xbf16>, vector<4x72xbf16>, vector<8x72xf32> -> vector<8x72xf32>
    %33 = arith.addf %28, %32 : vector<8x72xf32>
    %c0_33 = arith.constant 0 : index
    %c12_34 = arith.constant 12 : index
    %c1_35 = arith.constant 1 : index
    %34 = vector.load %arg2[%c0_33, %c12_34, %c1_35] : memref<1x16x90xbf16, #tpu.memory_space<vmem>>, vector<1x4x72xbf16>
    %35 = vector.shape_cast %34 : vector<1x4x72xbf16> to vector<4x72xbf16>
    %c0_36 = arith.constant 0 : index
    %c28 = arith.constant 28 : index
    %36 = vector.load %arg3[%c0_36, %c28] : memref<8x64xbf16, #tpu.memory_space<vmem>>, vector<8x4xbf16>
    %cst_37 = arith.constant dense<0.000000e+00> : vector<8x72xf32>
    %37 = tpu.matmul %36, %35, %cst_37 {dimension_numbers = #tpu.dot_dimension_numbers<[1], [0], [0], [1], [0, 0, 1, 1], [], []>} : vector<8x4xbf16>, vector<4x72xbf16>, vector<8x72xf32> -> vector<8x72xf32>
    %38 = arith.addf %33, %37 : vector<8x72xf32>
    %c0_38 = arith.constant 0 : index
    %c0_39 = arith.constant 0 : index
    %c9 = arith.constant 9 : index
    %39 = vector.load %arg2[%c0_38, %c0_39, %c9] : memref<1x16x90xbf16, #tpu.memory_space<vmem>>, vector<1x4x72xbf16>
    %40 = vector.shape_cast %39 : vector<1x4x72xbf16> to vector<4x72xbf16>
    %c0_40 = arith.constant 0 : index
    %c32 = arith.constant 32 : index
    %41 = vector.load %arg3[%c0_40, %c32] : memref<8x64xbf16, #tpu.memory_space<vmem>>, vector<8x4xbf16>
    %cst_41 = arith.constant dense<0.000000e+00> : vector<8x72xf32>
    %42 = tpu.matmul %41, %40, %cst_41 {dimension_numbers = #tpu.dot_dimension_numbers<[1], [0], [0], [1], [0, 0, 1, 1], [], []>} : vector<8x4xbf16>, vector<4x72xbf16>, vector<8x72xf32> -> vector<8x72xf32>
    %43 = arith.addf %38, %42 : vector<8x72xf32>
    %c0_42 = arith.constant 0 : index
    %c4_43 = arith.constant 4 : index
    %c9_44 = arith.constant 9 : index
    %44 = vector.load %arg2[%c0_42, %c4_43, %c9_44] : memref<1x16x90xbf16, #tpu.memory_space<vmem>>, vector<1x4x72xbf16>
    %45 = vector.shape_cast %44 : vector<1x4x72xbf16> to vector<4x72xbf16>
    %c0_45 = arith.constant 0 : index
    %c36 = arith.constant 36 : index
    %46 = vector.load %arg3[%c0_45, %c36] : memref<8x64xbf16, #tpu.memory_space<vmem>>, vector<8x4xbf16>
    %cst_46 = arith.constant dense<0.000000e+00> : vector<8x72xf32>
    %47 = tpu.matmul %46, %45, %cst_46 {dimension_numbers = #tpu.dot_dimension_numbers<[1], [0], [0], [1], [0, 0, 1, 1], [], []>} : vector<8x4xbf16>, vector<4x72xbf16>, vector<8x72xf32> -> vector<8x72xf32>
    %48 = arith.addf %43, %47 : vector<8x72xf32>
    %c0_47 = arith.constant 0 : index
    %c0_48 = arith.constant 0 : index
    %c10 = arith.constant 10 : index
    %49 = vector.load %arg2[%c0_47, %c0_48, %c10] : memref<1x16x90xbf16, #tpu.memory_space<vmem>>, vector<1x4x72xbf16>
    %50 = vector.shape_cast %49 : vector<1x4x72xbf16> to vector<4x72xbf16>
    %c0_49 = arith.constant 0 : index
    %c40 = arith.constant 40 : index
    %51 = vector.load %arg3[%c0_49, %c40] : memref<8x64xbf16, #tpu.memory_space<vmem>>, vector<8x4xbf16>
    %cst_50 = arith.constant dense<0.000000e+00> : vector<8x72xf32>
    %52 = tpu.matmul %51, %50, %cst_50 {dimension_numbers = #tpu.dot_dimension_numbers<[1], [0], [0], [1], [0, 0, 1, 1], [], []>} : vector<8x4xbf16>, vector<4x72xbf16>, vector<8x72xf32> -> vector<8x72xf32>
    %53 = arith.addf %48, %52 : vector<8x72xf32>
    %c0_51 = arith.constant 0 : index
    %c4_52 = arith.constant 4 : index
    %c10_53 = arith.constant 10 : index
    %54 = vector.load %arg2[%c0_51, %c4_52, %c10_53] : memref<1x16x90xbf16, #tpu.memory_space<vmem>>, vector<1x4x72xbf16>
    %55 = vector.shape_cast %54 : vector<1x4x72xbf16> to vector<4x72xbf16>
    %c0_54 = arith.constant 0 : index
    %c44 = arith.constant 44 : index
    %56 = vector.load %arg3[%c0_54, %c44] : memref<8x64xbf16, #tpu.memory_space<vmem>>, vector<8x4xbf16>
    %cst_55 = arith.constant dense<0.000000e+00> : vector<8x72xf32>
    %57 = tpu.matmul %56, %55, %cst_55 {dimension_numbers = #tpu.dot_dimension_numbers<[1], [0], [0], [1], [0, 0, 1, 1], [], []>} : vector<8x4xbf16>, vector<4x72xbf16>, vector<8x72xf32> -> vector<8x72xf32>
    %58 = arith.addf %53, %57 : vector<8x72xf32>
    %c0_56 = arith.constant 0 : index
    %c8_57 = arith.constant 8 : index
    %c9_58 = arith.constant 9 : index
    %59 = vector.load %arg2[%c0_56, %c8_57, %c9_58] : memref<1x16x90xbf16, #tpu.memory_space<vmem>>, vector<1x4x72xbf16>
    %60 = vector.shape_cast %59 : vector<1x4x72xbf16> to vector<4x72xbf16>
    %c0_59 = arith.constant 0 : index
    %c48 = arith.constant 48 : index
    %61 = vector.load %arg3[%c0_59, %c48] : memref<8x64xbf16, #tpu.memory_space<vmem>>, vector<8x4xbf16>
    %cst_60 = arith.constant dense<0.000000e+00> : vector<8x72xf32>
    %62 = tpu.matmul %61, %60, %cst_60 {dimension_numbers = #tpu.dot_dimension_numbers<[1], [0], [0], [1], [0, 0, 1, 1], [], []>} : vector<8x4xbf16>, vector<4x72xbf16>, vector<8x72xf32> -> vector<8x72xf32>
    %63 = arith.addf %58, %62 : vector<8x72xf32>
    %c0_61 = arith.constant 0 : index
    %c12_62 = arith.constant 12 : index
    %c9_63 = arith.constant 9 : index
    %64 = vector.load %arg2[%c0_61, %c12_62, %c9_63] : memref<1x16x90xbf16, #tpu.memory_space<vmem>>, vector<1x4x72xbf16>
    %65 = vector.shape_cast %64 : vector<1x4x72xbf16> to vector<4x72xbf16>
    %c0_64 = arith.constant 0 : index
    %c52 = arith.constant 52 : index
    %66 = vector.load %arg3[%c0_64, %c52] : memref<8x64xbf16, #tpu.memory_space<vmem>>, vector<8x4xbf16>
    %cst_65 = arith.constant dense<0.000000e+00> : vector<8x72xf32>
    %67 = tpu.matmul %66, %65, %cst_65 {dimension_numbers = #tpu.dot_dimension_numbers<[1], [0], [0], [1], [0, 0, 1, 1], [], []>} : vector<8x4xbf16>, vector<4x72xbf16>, vector<8x72xf32> -> vector<8x72xf32>
    %68 = arith.addf %63, %67 : vector<8x72xf32>
    %c0_66 = arith.constant 0 : index
    %c8_67 = arith.constant 8 : index
    %c10_68 = arith.constant 10 : index
    %69 = vector.load %arg2[%c0_66, %c8_67, %c10_68] : memref<1x16x90xbf16, #tpu.memory_space<vmem>>, vector<1x4x72xbf16>
    %70 = vector.shape_cast %69 : vector<1x4x72xbf16> to vector<4x72xbf16>
    %c0_69 = arith.constant 0 : index
    %c56 = arith.constant 56 : index
    %71 = vector.load %arg3[%c0_69, %c56] : memref<8x64xbf16, #tpu.memory_space<vmem>>, vector<8x4xbf16>
    %cst_70 = arith.constant dense<0.000000e+00> : vector<8x72xf32>
    %72 = tpu.matmul %71, %70, %cst_70 {dimension_numbers = #tpu.dot_dimension_numbers<[1], [0], [0], [1], [0, 0, 1, 1], [], []>} : vector<8x4xbf16>, vector<4x72xbf16>, vector<8x72xf32> -> vector<8x72xf32>
    %73 = arith.addf %68, %72 : vector<8x72xf32>
    %c0_71 = arith.constant 0 : index
    %c12_72 = arith.constant 12 : index
    %c10_73 = arith.constant 10 : index
    %74 = vector.load %arg2[%c0_71, %c12_72, %c10_73] : memref<1x16x90xbf16, #tpu.memory_space<vmem>>, vector<1x4x72xbf16>
    %75 = vector.shape_cast %74 : vector<1x4x72xbf16> to vector<4x72xbf16>
    %c0_74 = arith.constant 0 : index
    %c60 = arith.constant 60 : index
    %76 = vector.load %arg3[%c0_74, %c60] : memref<8x64xbf16, #tpu.memory_space<vmem>>, vector<8x4xbf16>
    %cst_75 = arith.constant dense<0.000000e+00> : vector<8x72xf32>
    %77 = tpu.matmul %76, %75, %cst_75 {dimension_numbers = #tpu.dot_dimension_numbers<[1], [0], [0], [1], [0, 0, 1, 1], [], []>} : vector<8x4xbf16>, vector<4x72xbf16>, vector<8x72xf32> -> vector<8x72xf32>
    %78 = arith.addf %73, %77 : vector<8x72xf32>
    %c0_76 = arith.constant 0 : index
    %c0_77 = arith.constant 0 : index
    %79 = vector.load %arg4[%c0_76, %c0_77] : memref<1x72xf32, #tpu.memory_space<vmem>>, vector<1x72xf32>
    %80 = vector.broadcast %79 : vector<1x72xf32> to vector<8x72xf32>
    %81 = arith.mulf %78, %80 : vector<8x72xf32>
    %cst_78 = arith.constant dense<0.000000e+00> : vector<8xf32>
    %82 = vector.multi_reduction <add>, %81, %cst_78 [1] : vector<8x72xf32> to vector<8xf32>
    %83 = vector.shape_cast %82 : vector<8xf32> to vector<8x1xf32>
    %84 = arith.mulf %78, %78 : vector<8x72xf32>
    %85 = vector.broadcast %79 : vector<1x72xf32> to vector<8x72xf32>
    %86 = arith.mulf %84, %85 : vector<8x72xf32>
    %cst_79 = arith.constant dense<0.000000e+00> : vector<8xf32>
    %87 = vector.multi_reduction <add>, %86, %cst_79 [1] : vector<8x72xf32> to vector<8xf32>
    %88 = vector.shape_cast %87 : vector<8xf32> to vector<8x1xf32>
    %cst_80 = arith.constant 1.562500e-02 : f32
    %89 = vector.broadcast %cst_80 : f32 to vector<8x1xf32>
    %90 = arith.mulf %83, %89 : vector<8x1xf32>
    %cst_81 = arith.constant 1.562500e-02 : f32
    %91 = vector.broadcast %cst_81 : f32 to vector<8x1xf32>
    %92 = arith.mulf %88, %91 : vector<8x1xf32>
    %93 = arith.mulf %90, %90 : vector<8x1xf32>
    %94 = arith.subf %92, %93 : vector<8x1xf32>
    %cst_82 = arith.constant 0.000000e+00 : f32
    %95 = vector.broadcast %cst_82 : f32 to vector<8x1xf32>
    %96 = arith.maximumf %94, %95 : vector<8x1xf32>
    %97 = vector.broadcast %90 : vector<8x1xf32> to vector<8x72xf32>
    %98 = arith.subf %78, %97 : vector<8x72xf32>
    %cst_83 = arith.constant 9.99999974E-6 : f32
    %99 = vector.broadcast %cst_83 : f32 to vector<8x1xf32>
    %100 = arith.addf %96, %99 : vector<8x1xf32>
    %101 = math.rsqrt %100 : vector<8x1xf32>
    %102 = vector.broadcast %101 : vector<8x1xf32> to vector<8x72xf32>
    %103 = arith.mulf %98, %102 : vector<8x72xf32>
    %cst_84 = arith.constant 2.000000e-01 : f32
    %104 = vector.broadcast %cst_84 : f32 to vector<8x72xf32>
    %105 = arith.mulf %104, %103 : vector<8x72xf32>
    %106 = arith.maximumf %103, %105 : vector<8x72xf32>
    %107 = arith.truncf %106 : vector<8x72xf32> to vector<8x72xbf16>
    %c0_85 = arith.constant 0 : index
    %c0_86 = arith.constant 0 : index
    %c0_87 = arith.constant 0 : index
    %108 = vector.load %arg5[%c0_85, %c0_86, %c0_87] : memref<1x8x72xbf16, #tpu.memory_space<vmem>>, vector<1x8x72xbf16>
    %109 = vector.shape_cast %108 : vector<1x8x72xbf16> to vector<8x72xbf16>
    %110 = vector.shape_cast %107 : vector<8x72xbf16> to vector<1x8x72xbf16>
    tpu.vector_store %arg5[%c0_85, %c0_86, %c0_87], %110 {strides = array<i32>} : memref<1x8x72xbf16, #tpu.memory_space<vmem>>, vector<1x8x72xbf16>,
    return
  }
  func.func @transform_0(%arg0: i32, %arg1: i32) -> (i32, i32, i32) {
    %c0_i32 = arith.constant 0 : i32
    %c0_i32_0 = arith.constant 0 : i32
    %c0_i32_1 = arith.constant 0 : i32
    return %arg0, %c0_i32, %c0_i32_0 : i32, i32, i32
  }
  func.func @transform_1(%arg0: i32, %arg1: i32) -> (i32, i32) {
    %c0_i32 = arith.constant 0 : i32
    %c0_i32_0 = arith.constant 0 : i32
    return %arg1, %c0_i32 : i32, i32
  }
  func.func @transform_2(%arg0: i32, %arg1: i32) -> (i32, i32) {
    %c0_i32 = arith.constant 0 : i32
    %c0_i32_0 = arith.constant 0 : i32
    %c0_i32_1 = arith.constant 0 : i32
    return %c0_i32, %c0_i32_0 : i32, i32
  }
  func.func @transform_3(%arg0: i32, %arg1: i32) -> (i32, i32, i32) {
    %c0_i32 = arith.constant 0 : i32
    %c0_i32_0 = arith.constant 0 : i32
    return %arg0, %arg1, %c0_i32 : i32, i32, i32
  }
}

</mosaic_0001>

<llo_original>
// kernel: conv_block_forward.1
$region0: #{conv_block_forward.1}
  #allocation0 [shape = 'u32[]', space=smem, size = 0x4, offset = 0x4, fixed_abs, tag = 'smem constant byte address 0x4 - core index']
  #allocation1 [shape = 'u32[144,128]{1,0:T(1,128)}', space=vmem, size = 0x12000, scoped, tag = 'internal scratch']
  %s0 = inlined_call_operand.vmem [shape: bf16[2,16,90], index: 0, kind: input, shape index: {}]
  %s1 = inlined_call_operand.vmem [shape: bf16[8,64], index: 1, kind: input, shape index: {}]
  %s2 = inlined_call_operand.vmem [shape: f32[1,72], index: 2, kind: input, shape index: {}]
  %s3 = inlined_call_operand.vmem [shape: bf16[2,8,72], index: 3, kind: output, shape index: {}]
  %s4 = sld [smem:[#allocation0]]
  $region45: #{conv_block_forward.1} parent=0
    _
  %s6 = ssub.s32 1, %s4
  %s7 = scalar_select 0, %s6, %s4
  loop: start=0, step=1, limit=4
  $region2: #{conv_block_forward.1} parent=0 // loop_pre_header
    _
  $region3: #{conv_block_forward.1} parent=0 // loop_header
    %s9 = sphi 0, %s13
    %p10 = scmp.ge.s32.totalorder %s9, 4
    %s16 = sphi 0, %s28
    %s17 = sphi 0, %s24
    %s18 = sphi 0, %s16
    %s19 = sphi 0, %s17
    %s20 = sphi 0, %s18
    %s21 = sphi 0, %s19
    %s31 = sphi 0, %s33
    %s34 = sphi 0, %s31
    %s35 = sphi 0, %s34
    %s51 = sphi 0, %s35
    %s57 = sphi 0, %s59
    %s60 = sphi 0, %s57
    %s61 = sphi 0, %s60
    %s77 = sphi 0, %s61
    %s81 = sphi 0, %s81
    %s83 = sphi 0, %s81
    %s84 = sphi 0, %s83
    %s98 = sphi 0, %s84
    %s106 = sphi 0, %s108
    %s109 = sphi 0, %s106
    %s110 = sphi 0, %s109
    %s126 = sphi 0, %s110
  $region4: #{conv_block_forward.1} parent=0 // loop_header_branch
    %12 = sbr.rel (%p10) target = $region8
  $region5: #{conv_block_forward.1} parent=0 // loop_body
    %s14 = ssub.s32 %s9, 1
    %s15 = ssub.s32 %s9, 2
    %s22 = sadd.s32 1, %s17
    %p23 = scmp.ge.s32.totalorder %s22, 1
    %s24 = scalar_select %p23, 0, %s22
    %s25 = sadd.s32 1, %s16
    %s26 = scalar_select %p23, %s25, %s16
    %p27 = scmp.ge.s32.totalorder %s26, 2
    %s28 = scalar_select %p27, 0, %s26
    %s29 = ssub.s32 %s16, %s28
    %p30 = scmp.eq.s32.totalorder %s29, 0
    %s32 = sadd.s32 %s31, 1
    %s33 = scalar_select %p30, %s31, %s32
    %p36 = pneg %p30
    %p37 = scmp.eq.s32.totalorder %s9, 1
    %p38 = por %p36, %p37
    %p39 = scmp.ne.s32.totalorder %s31, %s34
    %p40 = scmp.eq.s32.totalorder %s9, 0
    %p41 = por %p39, %p40
    %p42 = scmp.ne.s32.totalorder %s31, %s34
    %p43 = scmp.eq.s32.totalorder %s14, 1
    %p44 = por %p42, %p43
    %p45 = scmp.ne.s32.totalorder %s34, %s35
    %p46 = scmp.eq.s32.totalorder %s14, 0
    %p47 = por %p45, %p46
    %p48 = scmp.ne.s32.totalorder %s34, %s35
    %p49 = scmp.eq.s32.totalorder %s15, 1
    %p50 = por %p48, %p49
    %p52 = scmp.ne.s32.totalorder %s35, %s51
    %p53 = scmp.eq.s32.totalorder %s15, 0
    %p54 = por %p52, %p53
    %s55 = ssub.s32 %s17, %s24
    %p56 = scmp.eq.s32.totalorder %s55, 0
    %s58 = sadd.s32 %s57, 1
    %s59 = scalar_select %p56, %s57, %s58
    %p62 = pneg %p56
    %p63 = scmp.eq.s32.totalorder %s9, 1
    %p64 = por %p62, %p63
    %p65 = scmp.ne.s32.totalorder %s57, %s60
    %p66 = scmp.eq.s32.totalorder %s9, 0
    %p67 = por %p65, %p66
    %p68 = scmp.ne.s32.totalorder %s57, %s60
    %p69 = scmp.eq.s32.totalorder %s14, 1
    %p70 = por %p68, %p69
    %p71 = scmp.ne.s32.totalorder %s60, %s61
    %p72 = scmp.eq.s32.totalorder %s14, 0
    %p73 = por %p71, %p72
    %p74 = scmp.ne.s32.totalorder %s60, %s61
    %p75 = scmp.eq.s32.totalorder %s15, 1
    %p76 = por %p74, %p75
    %p78 = scmp.ne.s32.totalorder %s61, %s77
    %p79 = scmp.eq.s32.totalorder %s15, 0
    %p80 = por %p78, %p79
    %s82 = sadd.s32 %s81, 1
    %p85 = scmp.eq.s32.totalorder %s9, 1
    %p86 = scmp.ne.s32.totalorder %s81, %s83
    %p87 = scmp.eq.s32.totalorder %s9, 0
    %p88 = por %p86, %p87
    %p89 = scmp.ne.s32.totalorder %s81, %s83
    %p90 = scmp.eq.s32.totalorder %s14, 1
    %p91 = por %p89, %p90
    %p92 = scmp.ne.s32.totalorder %s83, %s84
    %p93 = scmp.eq.s32.totalorder %s14, 0
    %p94 = por %p92, %p93
    %p95 = scmp.ne.s32.totalorder %s83, %s84
    %p96 = scmp.eq.s32.totalorder %s15, 1
    %p97 = por %p95, %p96
    %p99 = scmp.ne.s32.totalorder %s84, %s98
    %p100 = scmp.eq.s32.totalorder %s15, 0
    %p101 = por %p99, %p100
    %s102 = ssub.s32 %s16, %s28
    %s103 = ssub.s32 %s17, %s24
    %s104 = sor.u32 %s102, %s103
    %p105 = scmp.eq.s32.totalorder %s104, 0
    %s107 = sadd.s32 %s106, 1
    %s108 = scalar_select %p105, %s106, %s107
    %p111 = pneg %p105
    %p112 = scmp.eq.s32.totalorder %s9, 1
    %p113 = por %p111, %p112
    %p114 = scmp.ne.s32.totalorder %s106, %s109
    %p115 = scmp.eq.s32.totalorder %s9, 0
    %p116 = por %p114, %p115
    %p117 = scmp.ne.s32.totalorder %s106, %s109
    %p118 = scmp.eq.s32.totalorder %s14, 1
    %p119 = por %p117, %p118
    %p120 = scmp.ne.s32.totalorder %s109, %s110
    %p121 = scmp.eq.s32.totalorder %s14, 0
    %p122 = por %p120, %p121
    %p123 = scmp.ne.s32.totalorder %s109, %s110
    %p124 = scmp.eq.s32.totalorder %s15, 1
    %p125 = por %p123, %p124
    %p127 = scmp.ne.s32.totalorder %s110, %s126
    %p128 = scmp.eq.s32.totalorder %s15, 0
    %p129 = por %p127, %p128
    %p130 = scmp.le.s32.totalorder 1, %s9
    %p131 = scmp.lt.s32.totalorder %s9, 3
    %p132 = pnand %p130, %p131
    %p133 = pneg %p132
    // Predicated region
    $region9: #{conv_block_forward.1} parent=5 // pred_check
      _
    $region10: #{conv_block_forward.1} parent=5 // pred_check_branch
      %135 = sbr.rel (%p132) target = $region12
    $region11: #{conv_block_forward.1} parent=5 // pred_region
      %s136 = ssub.s32 %s9, 1
      // Predicated region
      $region13: #{conv_block_forward.1} parent=11 // pred_check
        %p137 = pneg %p73
      $region14: #{conv_block_forward.1} parent=11 // pred_check_branch
        %139 = sbr.rel (%p137) target = $region16
      $region15: #{conv_block_forward.1} parent=11 // pred_region
        %p140 = scmp.lt.s32.totalorder %s19, 0
        %s141 = scalar_select %p140, %s19, 0
        %s142 = smul.addr %s141, 4
        %s143 = scalar_lea.vmem %s1, %s142
      $region16: #{conv_block_forward.1} parent=11 // pred_fallthru
        _
      // Predicated region
      $region17: #{conv_block_forward.1} parent=11 // pred_check
        %p144 = pneg %p94
      $region18: #{conv_block_forward.1} parent=11 // pred_check_branch
        %146 = sbr.rel (%p144) target = $region20
      $region19: #{conv_block_forward.1} parent=11 // pred_region
        _
      $region20: #{conv_block_forward.1} parent=11 // pred_fallthru
        _
    $region12: #{conv_block_forward.1} parent=5 // pred_fallthru
      _
    %p147 = scmp.lt.s32.totalorder %s9, 2
    // Predicated region
    $region21: #{conv_block_forward.1} parent=5 // pred_check
      %p148 = pneg %p147
    $region22: #{conv_block_forward.1} parent=5 // pred_check_branch
      %150 = sbr.rel (%p148) target = $region24
    $region23: #{conv_block_forward.1} parent=5 // pred_region
      // Predicated region
      $region25: #{conv_block_forward.1} parent=23 // pred_check
        %p151 = pneg %p41
      $region26: #{conv_block_forward.1} parent=23 // pred_check_branch
        %153 = sbr.rel (%p151) target = $region28
      $region27: #{conv_block_forward.1} parent=23 // pred_region
        %p154 = scmp.lt.s32.totalorder %s16, 1
        %s155 = scalar_select %p154, %s16, 1
        %s156 = smul.addr %s155, 2
        %s157 = smul.addr %s156, 4
        %s158 = scalar_lea.vmem %s0, %s157
      $region28: #{conv_block_forward.1} parent=23 // pred_fallthru
        _
    $region24: #{conv_block_forward.1} parent=5 // pred_fallthru
      _
    %p159 = scmp.le.s32.totalorder 1, %s9
    %p160 = scmp.lt.s32.totalorder %s9, 3
    %p161 = pnand %p159, %p160
    %p162 = pneg %p161
    // Predicated region
    $region29: #{conv_block_forward.1} parent=5 // pred_check
      _
    $region30: #{conv_block_forward.1} parent=5 // pred_check_branch
      %164 = sbr.rel (%p161) target = $region32
    $region31: #{conv_block_forward.1} parent=5 // pred_region
      %s165 = ssub.s32 %s9, 1
      %p166 = scmp.lt.s32.totalorder %s18, 1
      %s167 = scalar_select %p166, %s18, 1
      %s168 = smul.addr %s167, 2
      %s169 = smul.addr %s168, 4
      %s170 = scalar_lea.vmem %s0, %s169
      %p171 = pneg %p47
      %p172 = pneg %p44
      %p173 = scmp.lt.s32.totalorder %s19, 0
      %s174 = scalar_select %p173, %s19, 0
      %s175 = smul.addr %s174, 4
      %s176 = scalar_lea.vmem %s1, %s175
      %p177 = pneg %p73
      %p178 = pneg %p70
      %p179 = pneg %p94
      %p180 = pneg %p91
      %p181 = pneg %p122
      %p182 = pneg %p119
      %p183 = scmp.lt.s32.totalorder %s18, 1
      %s184 = scalar_select %p183, %s18, 1
      %p185 = scmp.lt.s32.totalorder %s19, 0
      %s186 = scalar_select %p185, %s19, 0
      %s187 = sadd.s32 %s186, %s184
      %s188 = smul.addr %s187, 4
      %s189 = scalar_lea.vmem %s3, %s188
      %p190 = scmp.lt.s32.totalorder %s18, 1
      %s191 = scalar_select %p190, %s18, 1
      %s192 = smul.addr %s191, 2
      %s193 = smul.addr %s192, 4
      %s194 = scalar_lea.vmem %s0, %s193
      %p195 = scmp.lt.s32.totalorder %s19, 0
      %s196 = scalar_select %p195, %s19, 0
      %s197 = smul.addr %s196, 4
      %s198 = scalar_lea.vmem %s1, %s197
      %p199 = scmp.lt.s32.totalorder %s18, 1
      %s200 = scalar_select %p199, %s18, 1
      %p201 = scmp.lt.s32.totalorder %s19, 0
      %s202 = scalar_select %p201, %s19, 0
      %s203 = sadd.s32 %s202, %s200
      %s204 = smul.addr %s203, 4
      %s205 = scalar_lea.vmem %s3, %s204
      %v207 = vld [vmem:[%s194] sm:$0x3]
      %v208 = vld [vmem:[%s198] sm:$0xf]
      %v209 = vld [vmem:[%s194] sm:$0xc]
      %v211 = vunpack.c.l.b16 %v208
      %v212 = vpack.c.b16 %v211, %v211
      %213 = vrot.lane.b32.xlu0 %v212, 124
      %v214 = vpop.permute.xlu0 %213
      %v216 = vunpack.c.l.b16 %v209
      %v217 = vpack.c.b16 %v216, %v216
      %v218 = vrot.slane %v217, 2
      %vm219 = vcmask 31744
      %v221 = vsel %vm219, %v214, 0
      %vm223 = vcmask 1041408
      %v225 = vsel %vm223, %v218, 0
      %227 = vmatprep.subr.bf16.mxu0 0
      %228 = vmatpush1.bf16.msra.mxu0 %v225
      %229 = vmatprep.subr.bf16.mxu0 0
      %230 = vmatpush1.bf16.msra.mxu0 0
      %231 = vmatprep.subr.bf16.mxu0 0
      %232 = vmatpush1.bf16.msra.mxu0 0
      %233 = vmatprep.subr.bf16.mxu0 0
      %234 = vmatpush1.bf16.msra.mxu0 0
      %235 = vmatprep.subr.bf16.mxu0 0
      %236 = vmatpush1.bf16.msra.mxu0 0
      %237 = vmatprep.subr.bf16.mxu0 0
      %238 = vmatpush1.bf16.msra.mxu0 0
      %239 = vmatprep.subr.bf16.mxu0 0
      %240 = vmatpush1.bf16.msra.mxu0 0
      %241 = vmatprep.subr.bf16.mxu0 0
      %242 = vmatpush1.bf16.msra.mxu0 0
      %243 = vmatprep.subr.bf16.mxu0 0
      %244 = vmatpush1.bf16.msra.mxu0 0
      %245 = vmatprep.subr.bf16.mxu0 0
      %246 = vmatpush1.bf16.msra.mxu0 0
      %247 = vmatprep.subr.bf16.mxu0 0
      %248 = vmatpush1.bf16.msra.mxu0 0
      %249 = vmatprep.subr.bf16.mxu0 0
      %250 = vmatpush1.bf16.msra.mxu0 0
      %251 = vmatprep.subr.bf16.mxu0 0
      %252 = vmatpush1.bf16.msra.mxu0 0
      %253 = vmatprep.subr.bf16.mxu0 0
      %254 = vmatpush1.bf16.msra.mxu0 0
      %255 = vmatprep.subr.bf16.mxu0 0
      %256 = vmatpush1.bf16.msra.mxu0 0
      %257 = vmatprep.subr.bf16.mxu0 0
      %258 = vmatpush1.bf16.msra.mxu0 0
      %259 = vmatprep.mubr.bf16.mxu0 0
      %260 = vmatmul.mubr.bf16.gmra.mrb[0].mxu0 %v221
      %v261 = vpop.f32.mrb[0].mxu0
      %v262 = vadd.f32 0.0, %v261
      %v263 = vpop.f32.mrb[0].mxu0
      %v264 = vpop.f32.mrb[0].mxu0
      %v265 = vpop.f32.mrb[0].mxu0
      %266 = vdwg.mxu0
      %v268 = vsel %vm219, %v208, 0
      %v271 = vsel %vm223, %v207, 0
      %273 = vmatprep.subr.bf16.mxu0 0
      %274 = vmatpush1.bf16.msra.mxu0 %v271
      %275 = vmatprep.subr.bf16.mxu0 0
      %276 = vmatpush1.bf16.msra.mxu0 0
      %277 = vmatprep.subr.bf16.mxu0 0
      %278 = vmatpush1.bf16.msra.mxu0 0
      %279 = vmatprep.subr.bf16.mxu0 0
      %280 = vmatpush1.bf16.msra.mxu0 0
      %281 = vmatprep.subr.bf16.mxu0 0
      %282 = vmatpush1.bf16.msra.mxu0 0
      %283 = vmatprep.subr.bf16.mxu0 0
      %284 = vmatpush1.bf16.msra.mxu0 0
      %285 = vmatprep.subr.bf16.mxu0 0
      %286 = vmatpush1.bf16.msra.mxu0 0
      %287 = vmatprep.subr.bf16.mxu0 0
      %288 = vmatpush1.bf16.msra.mxu0 0
      %289 = vmatprep.subr.bf16.mxu0 0
      %290 = vmatpush1.bf16.msra.mxu0 0
      %291 = vmatprep.subr.bf16.mxu0 0
      %292 = vmatpush1.bf16.msra.mxu0 0
      %293 = vmatprep.subr.bf16.mxu0 0
      %294 = vmatpush1.bf16.msra.mxu0 0
      %295 = vmatprep.subr.bf16.mxu0 0
      %296 = vmatpush1.bf16.msra.mxu0 0
      %297 = vmatprep.subr.bf16.mxu0 0
      %298 = vmatpush1.bf16.msra.mxu0 0
      %299 = vmatprep.subr.bf16.mxu0 0
      %300 = vmatpush1.bf16.msra.mxu0 0
      %301 = vmatprep.subr.bf16.mxu0 0
      %302 = vmatpush1.bf16.msra.mxu0 0
      %303 = vmatprep.subr.bf16.mxu0 0
      %304 = vmatpush1.bf16.msra.mxu0 0
      %305 = vmatprep.mubr.bf16.mxu0 0
      %306 = vmatmul.mubr.bf16.gmra.mrb[0].mxu0 %v268
      %v307 = vpop.f32.mrb[0].mxu0
      %v308 = vadd.f32 %v262, %v307
      %v309 = vpop.f32.mrb[0].mxu0
      %v310 = vpop.f32.mrb[0].mxu0
      %v311 = vpop.f32.mrb[0].mxu0
      %312 = vdwg.mxu0
      %313 = vrot.lane.b32.xlu0 %v212, 120
      %v314 = vpop.permute.xlu0 %313
      %v316 = vunpack.c.l.b16 %v207
      %v317 = vpack.c.b16 %v316, %v316
      %318 = vrot.lane.b32.xlu0 %v317, 127
      %v319 = vpop.permute.xlu0 %318
      %v321 = vsel %vm219, %v314, 0
      %v324 = vsel %vm223, %v319, 0
      %326 = vmatprep.subr.bf16.mxu0 0
      %327 = vmatpush1.bf16.msra.mxu0 %v324
      %328 = vmatprep.subr.bf16.mxu0 0
      %329 = vmatpush1.bf16.msra.mxu0 0
      %330 = vmatprep.subr.bf16.mxu0 0
      %331 = vmatpush1.bf16.msra.mxu0 0
      %332 = vmatprep.subr.bf16.mxu0 0
      %333 = vmatpush1.bf16.msra.mxu0 0
      %334 = vmatprep.subr.bf16.mxu0 0
      %335 = vmatpush1.bf16.msra.mxu0 0
      %336 = vmatprep.subr.bf16.mxu0 0
      %337 = vmatpush1.bf16.msra.mxu0 0
      %338 = vmatprep.subr.bf16.mxu0 0
      %339 = vmatpush1.bf16.msra.mxu0 0
      %340 = vmatprep.subr.bf16.mxu0 0
      %341 = vmatpush1.bf16.msra.mxu0 0
      %342 = vmatprep.subr.bf16.mxu0 0
      %343 = vmatpush1.bf16.msra.mxu0 0
      %344 = vmatprep.subr.bf16.mxu0 0
      %345 = vmatpush1.bf16.msra.mxu0 0
      %346 = vmatprep.subr.bf16.mxu0 0
      %347 = vmatpush1.bf16.msra.mxu0 0
      %348 = vmatprep.subr.bf16.mxu0 0
      %349 = vmatpush1.bf16.msra.mxu0 0
      %350 = vmatprep.subr.bf16.mxu0 0
      %351 = vmatpush1.bf16.msra.mxu0 0
      %352 = vmatprep.subr.bf16.mxu0 0
      %353 = vmatpush1.bf16.msra.mxu0 0
      %354 = vmatprep.subr.bf16.mxu0 0
      %355 = vmatpush1.bf16.msra.mxu0 0
      %356 = vmatprep.subr.bf16.mxu0 0
      %357 = vmatpush1.bf16.msra.mxu0 0
      %358 = vmatprep.mubr.bf16.mxu0 0
      %359 = vmatmul.mubr.bf16.gmra.mrb[0].mxu0 %v321
      %v360 = vpop.f32.mrb[0].mxu0
      %v361 = vadd.f32 0.0, %v360
      %v362 = vpop.f32.mrb[0].mxu0
      %v363 = vpop.f32.mrb[0].mxu0
      %v364 = vpop.f32.mrb[0].mxu0
      %365 = vdwg.mxu0
      %v366 = vadd.f32 %v308, %v361
      %367 = vrot.lane.b32.xlu0 %v212, 116
      %v368 = vpop.permute.xlu0 %367
      %369 = vrot.lane.b32.xlu0 %v218, 127
      %v370 = vpop.permute.xlu0 %369
      %v372 = vsel %vm219, %v368, 0
      %v375 = vsel %vm223, %v370, 0
      %377 = vmatprep.subr.bf16.mxu0 0
      %378 = vmatpush1.bf16.msra.mxu0 %v375
      %379 = vmatprep.subr.bf16.mxu0 0
      %380 = vmatpush1.bf16.msra.mxu0 0
      %381 = vmatprep.subr.bf16.mxu0 0
      %382 = vmatpush1.bf16.msra.mxu0 0
      %383 = vmatprep.subr.bf16.mxu0 0
      %384 = vmatpush1.bf16.msra.mxu0 0
      %385 = vmatprep.subr.bf16.mxu0 0
      %386 = vmatpush1.bf16.msra.mxu0 0
      %387 = vmatprep.subr.bf16.mxu0 0
      %388 = vmatpush1.bf16.msra.mxu0 0
      %389 = vmatprep.subr.bf16.mxu0 0
      %390 = vmatpush1.bf16.msra.mxu0 0
      %391 = vmatprep.subr.bf16.mxu0 0
      %392 = vmatpush1.bf16.msra.mxu0 0
      %393 = vmatprep.subr.bf16.mxu0 0
      %394 = vmatpush1.bf16.msra.mxu0 0
      %395 = vmatprep.subr.bf16.mxu0 0
      %396 = vmatpush1.bf16.msra.mxu0 0
      %397 = vmatprep.subr.bf16.mxu0 0
      %398 = vmatpush1.bf16.msra.mxu0 0
      %399 = vmatprep.subr.bf16.mxu0 0
      %400 = vmatpush1.bf16.msra.mxu0 0
      %401 = vmatprep.subr.bf16.mxu0 0
      %402 = vmatpush1.bf16.msra.mxu0 0
      %403 = vmatprep.subr.bf16.mxu0 0
      %404 = vmatpush1.bf16.msra.mxu0 0
      %405 = vmatprep.subr.bf16.mxu0 0
      %406 = vmatpush1.bf16.msra.mxu0 0
      %407 = vmatprep.subr.bf16.mxu0 0
      %408 = vmatpush1.bf16.msra.mxu0 0
      %409 = vmatprep.mubr.bf16.mxu0 0
      %410 = vmatmul.mubr.bf16.gmra.mrb[0].mxu0 %v372
      %v411 = vpop.f32.mrb[0].mxu0
      %v412 = vadd.f32 0.0, %v411
      %v413 = vpop.f32.mrb[0].mxu0
      %v414 = vpop.f32.mrb[0].mxu0
      %v415 = vpop.f32.mrb[0].mxu0
      %416 = vdwg.mxu0
      %v417 = vadd.f32 %v366, %v412
      %v418 = vld [vmem:[%s194 + $0x4] sm:$0x3]
      %419 = vrot.lane.b32.xlu0 %v212, 112
      %v420 = vpop.permute.xlu0 %419
      %v422 = vsel %vm219, %v420, 0
      %v425 = vsel %vm223, %v418, 0
      %427 = vmatprep.subr.bf16.mxu0 0
      %428 = vmatpush1.bf16.msra.mxu0 %v425
      %429 = vmatprep.subr.bf16.mxu0 0
      %430 = vmatpush1.bf16.msra.mxu0 0
      %431 = vmatprep.subr.bf16.mxu0 0
      %432 = vmatpush1.bf16.msra.mxu0 0
      %433 = vmatprep.subr.bf16.mxu0 0
      %434 = vmatpush1.bf16.msra.mxu0 0
      %435 = vmatprep.subr.bf16.mxu0 0
      %436 = vmatpush1.bf16.msra.mxu0 0
      %437 = vmatprep.subr.bf16.mxu0 0
      %438 = vmatpush1.bf16.msra.mxu0 0
      %439 = vmatprep.subr.bf16.mxu0 0
      %440 = vmatpush1.bf16.msra.mxu0 0
      %441 = vmatprep.subr.bf16.mxu0 0
      %442 = vmatpush1.bf16.msra.mxu0 0
      %443 = vmatprep.subr.bf16.mxu0 0
      %444 = vmatpush1.bf16.msra.mxu0 0
      %445 = vmatprep.subr.bf16.mxu0 0
      %446 = vmatpush1.bf16.msra.mxu0 0
      %447 = vmatprep.subr.bf16.mxu0 0
      %448 = vmatpush1.bf16.msra.mxu0 0
      %449 = vmatprep.subr.bf16.mxu0 0
      %450 = vmatpush1.bf16.msra.mxu0 0
      %451 = vmatprep.subr.bf16.mxu0 0
      %452 = vmatpush1.bf16.msra.mxu0 0
      %453 = vmatprep.subr.bf16.mxu0 0
      %454 = vmatpush1.bf16.msra.mxu0 0
      %455 = vmatprep.subr.bf16.mxu0 0
      %456 = vmatpush1.bf16.msra.mxu0 0
      %457 = vmatprep.subr.bf16.mxu0 0
      %458 = vmatpush1.bf16.msra.mxu0 0
      %459 = vmatprep.mubr.bf16.mxu0 0
      %460 = vmatmul.mubr.bf16.gmra.mrb[0].mxu0 %v422
      %v461 = vpop.f32.mrb[0].mxu0
      %v462 = vadd.f32 0.0, %v461
      %v463 = vpop.f32.mrb[0].mxu0
      %v464 = vpop.f32.mrb[0].mxu0
      %v465 = vpop.f32.mrb[0].mxu0
      %466 = vdwg.mxu0
      %v467 = vadd.f32 %v417, %v462
      %v468 = vld [vmem:[%s194 + $0x4] sm:$0xc]
      %469 = vrot.lane.b32.xlu0 %v212, 108
      %v470 = vpop.permute.xlu0 %469
      %v472 = vunpack.c.l.b16 %v468
      %v473 = vpack.c.b16 %v472, %v472
      %v474 = vrot.slane %v473, 2
      %v476 = vsel %vm219, %v470, 0
      %v479 = vsel %vm223, %v474, 0
      %481 = vmatprep.subr.bf16.mxu0 0
      %482 = vmatpush1.bf16.msra.mxu0 %v479
      %483 = vmatprep.subr.bf16.mxu0 0
      %484 = vmatpush1.bf16.msra.mxu0 0
      %485 = vmatprep.subr.bf16.mxu0 0
      %486 = vmatpush1.bf16.msra.mxu0 0
      %487 = vmatprep.subr.bf16.mxu0 0
      %488 = vmatpush1.bf16.msra.mxu0 0
      %489 = vmatprep.subr.bf16.mxu0 0
      %490 = vmatpush1.bf16.msra.mxu0 0
      %491 = vmatprep.subr.bf16.mxu0 0
      %492 = vmatpush1.bf16.msra.mxu0 0
      %493 = vmatprep.subr.bf16.mxu0 0
      %494 = vmatpush1.bf16.msra.mxu0 0
      %495 = vmatprep.subr.bf16.mxu0 0
      %496 = vmatpush1.bf16.msra.mxu0 0
      %497 = vmatprep.subr.bf16.mxu0 0
      %498 = vmatpush1.bf16.msra.mxu0 0
      %499 = vmatprep.subr.bf16.mxu0 0
      %500 = vmatpush1.bf16.msra.mxu0 0
      %501 = vmatprep.subr.bf16.mxu0 0
      %502 = vmatpush1.bf16.msra.mxu0 0
      %503 = vmatprep.subr.bf16.mxu0 0
      %504 = vmatpush1.bf16.msra.mxu0 0
      %505 = vmatprep.subr.bf16.mxu0 0
      %506 = vmatpush1.bf16.msra.mxu0 0
      %507 = vmatprep.subr.bf16.mxu0 0
      %508 = vmatpush1.bf16.msra.mxu0 0
      %509 = vmatprep.subr.bf16.mxu0 0
      %510 = vmatpush1.bf16.msra.mxu0 0
      %511 = vmatprep.subr.bf16.mxu0 0
      %512 = vmatpush1.bf16.msra.mxu0 0
      %513 = vmatprep.mubr.bf16.mxu0 0
      %514 = vmatmul.mubr.bf16.gmra.mrb[0].mxu0 %v476
      %v515 = vpop.f32.mrb[0].mxu0
      %v516 = vadd.f32 0.0, %v515
      %v517 = vpop.f32.mrb[0].mxu0
      %v518 = vpop.f32.mrb[0].mxu0
      %v519 = vpop.f32.mrb[0].mxu0
      %520 = vdwg.mxu0
      %v521 = vadd.f32 %v467, %v516
      %522 = vrot.lane.b32.xlu0 %v212, 104
      %v523 = vpop.permute.xlu0 %522
      %v525 = vunpack.c.l.b16 %v418
      %v526 = vpack.c.b16 %v525, %v525
      %527 = vrot.lane.b32.xlu0 %v526, 127
      %v528 = vpop.permute.xlu0 %527
      %v530 = vsel %vm219, %v523, 0
      %v533 = vsel %vm223, %v528, 0
      %535 = vmatprep.subr.bf16.mxu0 0
      %536 = vmatpush1.bf16.msra.mxu0 %v533
      %537 = vmatprep.subr.bf16.mxu0 0
      %538 = vmatpush1.bf16.msra.mxu0 0
      %539 = vmatprep.subr.bf16.mxu0 0
      %540 = vmatpush1.bf16.msra.mxu0 0
      %541 = vmatprep.subr.bf16.mxu0 0
      %542 = vmatpush1.bf16.msra.mxu0 0
      %543 = vmatprep.subr.bf16.mxu0 0
      %544 = vmatpush1.bf16.msra.mxu0 0
      %545 = vmatprep.subr.bf16.mxu0 0
      %546 = vmatpush1.bf16.msra.mxu0 0
      %547 = vmatprep.subr.bf16.mxu0 0
      %548 = vmatpush1.bf16.msra.mxu0 0
      %549 = vmatprep.subr.bf16.mxu0 0
      %550 = vmatpush1.bf16.msra.mxu0 0
      %551 = vmatprep.subr.bf16.mxu0 0
      %552 = vmatpush1.bf16.msra.mxu0 0
      %553 = vmatprep.subr.bf16.mxu0 0
      %554 = vmatpush1.bf16.msra.mxu0 0
      %555 = vmatprep.subr.bf16.mxu0 0
      %556 = vmatpush1.bf16.msra.mxu0 0
      %557 = vmatprep.subr.bf16.mxu0 0
      %558 = vmatpush1.bf16.msra.mxu0 0
      %559 = vmatprep.subr.bf16.mxu0 0
      %560 = vmatpush1.bf16.msra.mxu0 0
      %561 = vmatprep.subr.bf16.mxu0 0
      %562 = vmatpush1.bf16.msra.mxu0 0
      %563 = vmatprep.subr.bf16.mxu0 0
      %564 = vmatpush1.bf16.msra.mxu0 0
      %565 = vmatprep.subr.bf16.mxu0 0
      %566 = vmatpush1.bf16.msra.mxu0 0
      %567 = vmatprep.mubr.bf16.mxu0 0
      %568 = vmatmul.mubr.bf16.gmra.mrb[0].mxu0 %v530
      %v569 = vpop.f32.mrb[0].mxu0
      %v570 = vadd.f32 0.0, %v569
      %v571 = vpop.f32.mrb[0].mxu0
      %v572 = vpop.f32.mrb[0].mxu0
      %v573 = vpop.f32.mrb[0].mxu0
      %574 = vdwg.mxu0
      %v575 = vadd.f32 %v521, %v570
      %576 = vrot.lane.b32.xlu0 %v212, 100
      %v577 = vpop.permute.xlu0 %576
      %578 = vrot.lane.b32.xlu0 %v474, 127
      %v579 = vpop.permute.xlu0 %578
      %v581 = vsel %vm219, %v577, 0
      %v584 = vsel %vm223, %v579, 0
      %586 = vmatprep.subr.bf16.mxu0 0
      %587 = vmatpush1.bf16.msra.mxu0 %v584
      %588 = vmatprep.subr.bf16.mxu0 0
      %589 = vmatpush1.bf16.msra.mxu0 0
      %590 = vmatprep.subr.bf16.mxu0 0
      %591 = vmatpush1.bf16.msra.mxu0 0
      %592 = vmatprep.subr.bf16.mxu0 0
      %593 = vmatpush1.bf16.msra.mxu0 0
      %594 = vmatprep.subr.bf16.mxu0 0
      %595 = vmatpush1.bf16.msra.mxu0 0
      %596 = vmatprep.subr.bf16.mxu0 0
      %597 = vmatpush1.bf16.msra.mxu0 0
      %598 = vmatprep.subr.bf16.mxu0 0
      %599 = vmatpush1.bf16.msra.mxu0 0
      %600 = vmatprep.subr.bf16.mxu0 0
      %601 = vmatpush1.bf16.msra.mxu0 0
      %602 = vmatprep.subr.bf16.mxu0 0
      %603 = vmatpush1.bf16.msra.mxu0 0
      %604 = vmatprep.subr.bf16.mxu0 0
      %605 = vmatpush1.bf16.msra.mxu0 0
      %606 = vmatprep.subr.bf16.mxu0 0
      %607 = vmatpush1.bf16.msra.mxu0 0
      %608 = vmatprep.subr.bf16.mxu0 0
      %609 = vmatpush1.bf16.msra.mxu0 0
      %610 = vmatprep.subr.bf16.mxu0 0
      %611 = vmatpush1.bf16.msra.mxu0 0
      %612 = vmatprep.subr.bf16.mxu0 0
      %613 = vmatpush1.bf16.msra.mxu0 0
      %614 = vmatprep.subr.bf16.mxu0 0
      %615 = vmatpush1.bf16.msra.mxu0 0
      %616 = vmatprep.subr.bf16.mxu0 0
      %617 = vmatpush1.bf16.msra.mxu0 0
      %618 = vmatprep.mubr.bf16.mxu0 0
      %619 = vmatmul.mubr.bf16.gmra.mrb[0].mxu0 %v581
      %v620 = vpop.f32.mrb[0].mxu0
      %v621 = vadd.f32 0.0, %v620
      %v622 = vpop.f32.mrb[0].mxu0
      %v623 = vpop.f32.mrb[0].mxu0
      %v624 = vpop.f32.mrb[0].mxu0
      %625 = vdwg.mxu0
      %v626 = vadd.f32 %v575, %v621
      %627 = vrot.lane.b32.xlu0 %v212, 96
      %v628 = vpop.permute.xlu0 %627
      %629 = vrot.lane.b32.xlu0 %v317, 119
      %v630 = vpop.permute.xlu0 %629
      %v632 = vsel %vm219, %v628, 0
      %v635 = vsel %vm223, %v630, 0
      %637 = vmatprep.subr.bf16.mxu0 0
      %638 = vmatpush1.bf16.msra.mxu0 %v635
      %639 = vmatprep.subr.bf16.mxu0 0
      %640 = vmatpush1.bf16.msra.mxu0 0
      %641 = vmatprep.subr.bf16.mxu0 0
      %642 = vmatpush1.bf16.msra.mxu0 0
      %643 = vmatprep.subr.bf16.mxu0 0
      %644 = vmatpush1.bf16.msra.mxu0 0
      %645 = vmatprep.subr.bf16.mxu0 0
      %646 = vmatpush1.bf16.msra.mxu0 0
      %647 = vmatprep.subr.bf16.mxu0 0
      %648 = vmatpush1.bf16.msra.mxu0 0
      %649 = vmatprep.subr.bf16.mxu0 0
      %650 = vmatpush1.bf16.msra.mxu0 0
      %651 = vmatprep.subr.bf16.mxu0 0
      %652 = vmatpush1.bf16.msra.mxu0 0
      %653 = vmatprep.subr.bf16.mxu0 0
      %654 = vmatpush1.bf16.msra.mxu0 0
      %655 = vmatprep.subr.bf16.mxu0 0
      %656 = vmatpush1.bf16.msra.mxu0 0
      %657 = vmatprep.subr.bf16.mxu0 0
      %658 = vmatpush1.bf16.msra.mxu0 0
      %659 = vmatprep.subr.bf16.mxu0 0
      %660 = vmatpush1.bf16.msra.mxu0 0
      %661 = vmatprep.subr.bf16.mxu0 0
      %662 = vmatpush1.bf16.msra.mxu0 0
      %663 = vmatprep.subr.bf16.mxu0 0
      %664 = vmatpush1.bf16.msra.mxu0 0
      %665 = vmatprep.subr.bf16.mxu0 0
      %666 = vmatpush1.bf16.msra.mxu0 0
      %667 = vmatprep.subr.bf16.mxu0 0
      %668 = vmatpush1.bf16.msra.mxu0 0
      %669 = vmatprep.mubr.bf16.mxu0 0
      %670 = vmatmul.mubr.bf16.gmra.mrb[0].mxu0 %v632
      %v671 = vpop.f32.mrb[0].mxu0
      %v672 = vadd.f32 0.0, %v671
      %v673 = vpop.f32.mrb[0].mxu0
      %v674 = vpop.f32.mrb[0].mxu0
      %v675 = vpop.f32.mrb[0].mxu0
      %676 = vdwg.mxu0
      %v677 = vadd.f32 %v626, %v672
      %678 = vrot.lane.b32.xlu0 %v212, 92
      %v679 = vpop.permute.xlu0 %678
      %680 = vrot.lane.b32.xlu0 %v218, 119
      %v681 = vpop.permute.xlu0 %680
      %v683 = vsel %vm219, %v679, 0
      %v686 = vsel %vm223, %v681, 0
      %688 = vmatprep.subr.bf16.mxu0 0
      %689 = vmatpush1.bf16.msra.mxu0 %v686
      %690 = vmatprep.subr.bf16.mxu0 0
      %691 = vmatpush1.bf16.msra.mxu0 0
      %692 = vmatprep.subr.bf16.mxu0 0
      %693 = vmatpush1.bf16.msra.mxu0 0
      %694 = vmatprep.subr.bf16.mxu0 0
      %695 = vmatpush1.bf16.msra.mxu0 0
      %696 = vmatprep.subr.bf16.mxu0 0
      %697 = vmatpush1.bf16.msra.mxu0 0
      %698 = vmatprep.subr.bf16.mxu0 0
      %699 = vmatpush1.bf16.msra.mxu0 0
      %700 = vmatprep.subr.bf16.mxu0 0
      %701 = vmatpush1.bf16.msra.mxu0 0
      %702 = vmatprep.subr.bf16.mxu0 0
      %703 = vmatpush1.bf16.msra.mxu0 0
      %704 = vmatprep.subr.bf16.mxu0 0
      %705 = vmatpush1.bf16.msra.mxu0 0
      %706 = vmatprep.subr.bf16.mxu0 0
      %707 = vmatpush1.bf16.msra.mxu0 0
      %708 = vmatprep.subr.bf16.mxu0 0
      %709 = vmatpush1.bf16.msra.mxu0 0
      %710 = vmatprep.subr.bf16.mxu0 0
      %711 = vmatpush1.bf16.msra.mxu0 0
      %712 = vmatprep.subr.bf16.mxu0 0
      %713 = vmatpush1.bf16.msra.mxu0 0
      %714 = vmatprep.subr.bf16.mxu0 0
      %715 = vmatpush1.bf16.msra.mxu0 0
      %716 = vmatprep.subr.bf16.mxu0 0
      %717 = vmatpush1.bf16.msra.mxu0 0
      %718 = vmatprep.subr.bf16.mxu0 0
      %719 = vmatpush1.bf16.msra.mxu0 0
      %720 = vmatprep.mubr.bf16.mxu0 0
      %721 = vmatmul.mubr.bf16.gmra.mrb[0].mxu0 %v683
      %v722 = vpop.f32.mrb[0].mxu0
      %v723 = vadd.f32 0.0, %v722
      %v724 = vpop.f32.mrb[0].mxu0
      %v725 = vpop.f32.mrb[0].mxu0
      %v726 = vpop.f32.mrb[0].mxu0
      %727 = vdwg.mxu0
      %v728 = vadd.f32 %v677, %v723
      %729 = vrot.lane.b32.xlu0 %v212, 88
      %v730 = vpop.permute.xlu0 %729
      %731 = vrot.lane.b32.xlu0 %v317, 118
      %v732 = vpop.permute.xlu0 %731
      %v734 = vsel %vm219, %v730, 0
      %v737 = vsel %vm223, %v732, 0
      %739 = vmatprep.subr.bf16.mxu0 0
      %740 = vmatpush1.bf16.msra.mxu0 %v737
      %741 = vmatprep.subr.bf16.mxu0 0
      %742 = vmatpush1.bf16.msra.mxu0 0
      %743 = vmatprep.subr.bf16.mxu0 0
      %744 = vmatpush1.bf16.msra.mxu0 0
      %745 = vmatprep.subr.bf16.mxu0 0
      %746 = vmatpush1.bf16.msra.mxu0 0
      %747 = vmatprep.subr.bf16.mxu0 0
      %748 = vmatpush1.bf16.msra.mxu0 0
      %749 = vmatprep.subr.bf16.mxu0 0
      %750 = vmatpush1.bf16.msra.mxu0 0
      %751 = vmatprep.subr.bf16.mxu0 0
      %752 = vmatpush1.bf16.msra.mxu0 0
      %753 = vmatprep.subr.bf16.mxu0 0
      %754 = vmatpush1.bf16.msra.mxu0 0
      %755 = vmatprep.subr.bf16.mxu0 0
      %756 = vmatpush1.bf16.msra.mxu0 0
      %757 = vmatprep.subr.bf16.mxu0 0
      %758 = vmatpush1.bf16.msra.mxu0 0
      %759 = vmatprep.subr.bf16.mxu0 0
      %760 = vmatpush1.bf16.msra.mxu0 0
      %761 = vmatprep.subr.bf16.mxu0 0
      %762 = vmatpush1.bf16.msra.mxu0 0
      %763 = vmatprep.subr.bf16.mxu0 0
      %764 = vmatpush1.bf16.msra.mxu0 0
      %765 = vmatprep.subr.bf16.mxu0 0
      %766 = vmatpush1.bf16.msra.mxu0 0
      %767 = vmatprep.subr.bf16.mxu0 0
      %768 = vmatpush1.bf16.msra.mxu0 0
      %769 = vmatprep.subr.bf16.mxu0 0
      %770 = vmatpush1.bf16.msra.mxu0 0
      %771 = vmatprep.mubr.bf16.mxu0 0
      %772 = vmatmul.mubr.bf16.gmra.mrb[0].mxu0 %v734
      %v773 = vpop.f32.mrb[0].mxu0
      %v774 = vadd.f32 0.0, %v773
      %v775 = vpop.f32.mrb[0].mxu0
      %v776 = vpop.f32.mrb[0].mxu0
      %v777 = vpop.f32.mrb[0].mxu0
      %778 = vdwg.mxu0
      %v779 = vadd.f32 %v728, %v774
      %780 = vrot.lane.b32.xlu0 %v212, 84
      %v781 = vpop.permute.xlu0 %780
      %782 = vrot.lane.b32.xlu0 %v218, 118
      %v783 = vpop.permute.xlu0 %782
      %v785 = vsel %vm219, %v781, 0
      %v788 = vsel %vm223, %v783, 0
      %790 = vmatprep.subr.bf16.mxu0 0
      %791 = vmatpush1.bf16.msra.mxu0 %v788
      %792 = vmatprep.subr.bf16.mxu0 0
      %793 = vmatpush1.bf16.msra.mxu0 0
      %794 = vmatprep.subr.bf16.mxu0 0
      %795 = vmatpush1.bf16.msra.mxu0 0
      %796 = vmatprep.subr.bf16.mxu0 0
      %797 = vmatpush1.bf16.msra.mxu0 0
      %798 = vmatprep.subr.bf16.mxu0 0
      %799 = vmatpush1.bf16.msra.mxu0 0
      %800 = vmatprep.subr.bf16.mxu0 0
      %801 = vmatpush1.bf16.msra.mxu0 0
      %802 = vmatprep.subr.bf16.mxu0 0
      %803 = vmatpush1.bf16.msra.mxu0 0
      %804 = vmatprep.subr.bf16.mxu0 0
      %805 = vmatpush1.bf16.msra.mxu0 0
      %806 = vmatprep.subr.bf16.mxu0 0
      %807 = vmatpush1.bf16.msra.mxu0 0
      %808 = vmatprep.subr.bf16.mxu0 0
      %809 = vmatpush1.bf16.msra.mxu0 0
      %810 = vmatprep.subr.bf16.mxu0 0
      %811 = vmatpush1.bf16.msra.mxu0 0
      %812 = vmatprep.subr.bf16.mxu0 0
      %813 = vmatpush1.bf16.msra.mxu0 0
      %814 = vmatprep.subr.bf16.mxu0 0
      %815 = vmatpush1.bf16.msra.mxu0 0
      %816 = vmatprep.subr.bf16.mxu0 0
      %817 = vmatpush1.bf16.msra.mxu0 0
      %818 = vmatprep.subr.bf16.mxu0 0
      %819 = vmatpush1.bf16.msra.mxu0 0
      %820 = vmatprep.subr.bf16.mxu0 0
      %821 = vmatpush1.bf16.msra.mxu0 0
      %822 = vmatprep.mubr.bf16.mxu0 0
      %823 = vmatmul.mubr.bf16.gmra.mrb[0].mxu0 %v785
      %v824 = vpop.f32.mrb[0].mxu0
      %v825 = vadd.f32 0.0, %v824
      %v826 = vpop.f32.mrb[0].mxu0
      %v827 = vpop.f32.mrb[0].mxu0
      %v828 = vpop.f32.mrb[0].mxu0
      %829 = vdwg.mxu0
      %v830 = vadd.f32 %v779, %v825
      %831 = vrot.lane.b32.xlu0 %v212, 80
      %v832 = vpop.permute.xlu0 %831
      %833 = vrot.lane.b32.xlu0 %v526, 119
      %v834 = vpop.permute.xlu0 %833
      %v836 = vsel %vm219, %v832, 0
      %v839 = vsel %vm223, %v834, 0
      %841 = vmatprep.subr.bf16.mxu0 0
      %842 = vmatpush1.bf16.msra.mxu0 %v839
      %843 = vmatprep.subr.bf16.mxu0 0
      %844 = vmatpush1.bf16.msra.mxu0 0
      %845 = vmatprep.subr.bf16.mxu0 0
      %846 = vmatpush1.bf16.msra.mxu0 0
      %847 = vmatprep.subr.bf16.mxu0 0
      %848 = vmatpush1.bf16.msra.mxu0 0
      %849 = vmatprep.subr.bf16.mxu0 0
      %850 = vmatpush1.bf16.msra.mxu0 0
      %851 = vmatprep.subr.bf16.mxu0 0
      %852 = vmatpush1.bf16.msra.mxu0 0
      %853 = vmatprep.subr.bf16.mxu0 0
      %854 = vmatpush1.bf16.msra.mxu0 0
      %855 = vmatprep.subr.bf16.mxu0 0
      %856 = vmatpush1.bf16.msra.mxu0 0
      %857 = vmatprep.subr.bf16.mxu0 0
      %858 = vmatpush1.bf16.msra.mxu0 0
      %859 = vmatprep.subr.bf16.mxu0 0
      %860 = vmatpush1.bf16.msra.mxu0 0
      %861 = vmatprep.subr.bf16.mxu0 0
      %862 = vmatpush1.bf16.msra.mxu0 0
      %863 = vmatprep.subr.bf16.mxu0 0
      %864 = vmatpush1.bf16.msra.mxu0 0
      %865 = vmatprep.subr.bf16.mxu0 0
      %866 = vmatpush1.bf16.msra.mxu0 0
      %867 = vmatprep.subr.bf16.mxu0 0
      %868 = vmatpush1.bf16.msra.mxu0 0
      %869 = vmatprep.subr.bf16.mxu0 0
      %870 = vmatpush1.bf16.msra.mxu0 0
      %871 = vmatprep.subr.bf16.mxu0 0
      %872 = vmatpush1.bf16.msra.mxu0 0
      %873 = vmatprep.mubr.bf16.mxu0 0
      %874 = vmatmul.mubr.bf16.gmra.mrb[0].mxu0 %v836
      %v875 = vpop.f32.mrb[0].mxu0
      %v876 = vadd.f32 0.0, %v875
      %v877 = vpop.f32.mrb[0].mxu0
      %v878 = vpop.f32.mrb[0].mxu0
      %v879 = vpop.f32.mrb[0].mxu0
      %880 = vdwg.mxu0
      %v881 = vadd.f32 %v830, %v876
      %882 = vrot.lane.b32.xlu0 %v212, 76
      %v883 = vpop.permute.xlu0 %882
      %884 = vrot.lane.b32.xlu0 %v474, 119
      %v885 = vpop.permute.xlu0 %884
      %v887 = vsel %vm219, %v883, 0
      %v890 = vsel %vm223, %v885, 0
      %892 = vmatprep.subr.bf16.mxu0 0
      %893 = vmatpush1.bf16.msra.mxu0 %v890
      %894 = vmatprep.subr.bf16.mxu0 0
      %895 = vmatpush1.bf16.msra.mxu0 0
      %896 = vmatprep.subr.bf16.mxu0 0
      %897 = vmatpush1.bf16.msra.mxu0 0
      %898 = vmatprep.subr.bf16.mxu0 0
      %899 = vmatpush1.bf16.msra.mxu0 0
      %900 = vmatprep.subr.bf16.mxu0 0
      %901 = vmatpush1.bf16.msra.mxu0 0
      %902 = vmatprep.subr.bf16.mxu0 0
      %903 = vmatpush1.bf16.msra.mxu0 0
      %904 = vmatprep.subr.bf16.mxu0 0
      %905 = vmatpush1.bf16.msra.mxu0 0
      %906 = vmatprep.subr.bf16.mxu0 0
      %907 = vmatpush1.bf16.msra.mxu0 0
      %908 = vmatprep.subr.bf16.mxu0 0
      %909 = vmatpush1.bf16.msra.mxu0 0
      %910 = vmatprep.subr.bf16.mxu0 0
      %911 = vmatpush1.bf16.msra.mxu0 0
      %912 = vmatprep.subr.bf16.mxu0 0
      %913 = vmatpush1.bf16.msra.mxu0 0
      %914 = vmatprep.subr.bf16.mxu0 0
      %915 = vmatpush1.bf16.msra.mxu0 0
      %916 = vmatprep.subr.bf16.mxu0 0
      %917 = vmatpush1.bf16.msra.mxu0 0
      %918 = vmatprep.subr.bf16.mxu0 0
      %919 = vmatpush1.bf16.msra.mxu0 0
      %920 = vmatprep.subr.bf16.mxu0 0
      %921 = vmatpush1.bf16.msra.mxu0 0
      %922 = vmatprep.subr.bf16.mxu0 0
      %923 = vmatpush1.bf16.msra.mxu0 0
      %924 = vmatprep.mubr.bf16.mxu0 0
      %925 = vmatmul.mubr.bf16.gmra.mrb[0].mxu0 %v887
      %v926 = vpop.f32.mrb[0].mxu0
      %v927 = vadd.f32 0.0, %v926
      %v928 = vpop.f32.mrb[0].mxu0
      %v929 = vpop.f32.mrb[0].mxu0
      %v930 = vpop.f32.mrb[0].mxu0
      %931 = vdwg.mxu0
      %v932 = vadd.f32 %v881, %v927
      %933 = vrot.lane.b32.xlu0 %v212, 72
      %v934 = vpop.permute.xlu0 %933
      %935 = vrot.lane.b32.xlu0 %v526, 118
      %v936 = vpop.permute.xlu0 %935
      %v938 = vsel %vm219, %v934, 0
      %v941 = vsel %vm223, %v936, 0
      %943 = vmatprep.subr.bf16.mxu0 0
      %944 = vmatpush1.bf16.msra.mxu0 %v941
      %945 = vmatprep.subr.bf16.mxu0 0
      %946 = vmatpush1.bf16.msra.mxu0 0
      %947 = vmatprep.subr.bf16.mxu0 0
      %948 = vmatpush1.bf16.msra.mxu0 0
      %949 = vmatprep.subr.bf16.mxu0 0
      %950 = vmatpush1.bf16.msra.mxu0 0
      %951 = vmatprep.subr.bf16.mxu0 0
      %952 = vmatpush1.bf16.msra.mxu0 0
      %953 = vmatprep.subr.bf16.mxu0 0
      %954 = vmatpush1.bf16.msra.mxu0 0
      %955 = vmatprep.subr.bf16.mxu0 0
      %956 = vmatpush1.bf16.msra.mxu0 0
      %957 = vmatprep.subr.bf16.mxu0 0
      %958 = vmatpush1.bf16.msra.mxu0 0
      %959 = vmatprep.subr.bf16.mxu0 0
      %960 = vmatpush1.bf16.msra.mxu0 0
      %961 = vmatprep.subr.bf16.mxu0 0
      %962 = vmatpush1.bf16.msra.mxu0 0
      %963 = vmatprep.subr.bf16.mxu0 0
      %964 = vmatpush1.bf16.msra.mxu0 0
      %965 = vmatprep.subr.bf16.mxu0 0
      %966 = vmatpush1.bf16.msra.mxu0 0
      %967 = vmatprep.subr.bf16.mxu0 0
      %968 = vmatpush1.bf16.msra.mxu0 0
      %969 = vmatprep.subr.bf16.mxu0 0
      %970 = vmatpush1.bf16.msra.mxu0 0
      %971 = vmatprep.subr.bf16.mxu0 0
      %972 = vmatpush1.bf16.msra.mxu0 0
      %973 = vmatprep.subr.bf16.mxu0 0
      %974 = vmatpush1.bf16.msra.mxu0 0
      %975 = vmatprep.mubr.bf16.mxu0 0
      %976 = vmatmul.mubr.bf16.gmra.mrb[0].mxu0 %v938
      %v977 = vpop.f32.mrb[0].mxu0
      %v978 = vadd.f32 0.0, %v977
      %v979 = vpop.f32.mrb[0].mxu0
      %v980 = vpop.f32.mrb[0].mxu0
      %v981 = vpop.f32.mrb[0].mxu0
      %982 = vdwg.mxu0
      %v983 = vadd.f32 %v932, %v978
      %984 = vrot.lane.b32.xlu0 %v212, 68
      %v985 = vpop.permute.xlu0 %984
      %986 = vrot.lane.b32.xlu0 %v474, 118
      %v987 = vpop.permute.xlu0 %986
      %v989 = vsel %vm219, %v985, 0
      %v992 = vsel %vm223, %v987, 0
      %994 = vmatprep.subr.bf16.mxu0 0
      %995 = vmatpush1.bf16.msra.mxu0 %v992
      %996 = vmatprep.subr.bf16.mxu0 0
      %997 = vmatpush1.bf16.msra.mxu0 0
      %998 = vmatprep.subr.bf16.mxu0 0
      %999 = vmatpush1.bf16.msra.mxu0 0
      %1000 = vmatprep.subr.bf16.mxu0 0
      %1001 = vmatpush1.bf16.msra.mxu0 0
      %1002 = vmatprep.subr.bf16.mxu0 0
      %1003 = vmatpush1.bf16.msra.mxu0 0
      %1004 = vmatprep.subr.bf16.mxu0 0
      %1005 = vmatpush1.bf16.msra.mxu0 0
      %1006 = vmatprep.subr.bf16.mxu0 0
      %1007 = vmatpush1.bf16.msra.mxu0 0
      %1008 = vmatprep.subr.bf16.mxu0 0
      %1009 = vmatpush1.bf16.msra.mxu0 0
      %1010 = vmatprep.subr.bf16.mxu0 0
      %1011 = vmatpush1.bf16.msra.mxu0 0
      %1012 = vmatprep.subr.bf16.mxu0 0
      %1013 = vmatpush1.bf16.msra.mxu0 0
      %1014 = vmatprep.subr.bf16.mxu0 0
      %1015 = vmatpush1.bf16.msra.mxu0 0
      %1016 = vmatprep.subr.bf16.mxu0 0
      %1017 = vmatpush1.bf16.msra.mxu0 0
      %1018 = vmatprep.subr.bf16.mxu0 0
      %1019 = vmatpush1.bf16.msra.mxu0 0
      %1020 = vmatprep.subr.bf16.mxu0 0
      %1021 = vmatpush1.bf16.msra.mxu0 0
      %1022 = vmatprep.subr.bf16.mxu0 0
      %1023 = vmatpush1.bf16.msra.mxu0 0
      %1024 = vmatprep.subr.bf16.mxu0 0
      %1025 = vmatpush1.bf16.msra.mxu0 0
      %1026 = vmatprep.mubr.bf16.mxu0 0
      %1027 = vmatmul.mubr.bf16.gmra.mrb[0].mxu0 %v989
      %v1028 = vpop.f32.mrb[0].mxu0
      %v1029 = vadd.f32 0.0, %v1028
      %v1030 = vpop.f32.mrb[0].mxu0
      %v1031 = vpop.f32.mrb[0].mxu0
      %v1032 = vpop.f32.mrb[0].mxu0
      %1033 = vdwg.mxu0
      %v1034 = vadd.f32 %v983, %v1029
      %v1035 = vld [vmem:[%s2] sm:$0x1]
      %v1037 = vlaneseq
      %v1038 = vshrl.u32 %v1037, 7
      %v1039 = vsub.s32 0, %v1038
      %v1040 = vrot.slane %v1035, %v1039
      %v1042 = vmul.f32 %v1034, %v1040
      %vm1043 = vcmask 588800
      %v1044 = vsel %vm1043, %v1042, 0.0
      %1045 = vadd.xlane.f32.xlu0 %v1044
      %v1046 = vpop.xlane.xlu0 %1045
      %v1047 = vmul.f32 %v1034, %v1034
      %v1048 = vmul.f32 %v1047, %v1040
      %v1049 = vsel %vm1043, %v1048, 0.0
      %1050 = vadd.xlane.f32.xlu0 %v1049
      %v1051 = vpop.xlane.xlu0 %1050
      %v1052 = vmul.f32 %v1046, 0.015625
      %v1053 = vmul.f32 %v1051, 0.015625
      %v1054 = vmul.f32 %v1052, %v1052
      %v1055 = vsub.f32 %v1053, %v1054
      %v1056 = vmax.f32 %v1055, 0.0
      %v1057 = vsub.f32 %v1034, %v1052
      %v1058 = vadd.f32 %v1056, 1e-05
      %v1059 = vrsqrt.pop %v1058
      %v1060 = vmul.f32 %v1057, %v1059
      %v1061 = vmul.f32 %v1060, 0.2
      %v1062 = vmax.f32 %v1060, %v1061
      %v1063 = vpack.c.bf16 %v1062, %v1062
      %vm1064 = vcmask 584704
      %1065 = vst.msk [vmem:[%s205] sm:$0xf] %vm1064, %v1063
      %p1066 = scmp.lt.s32.totalorder %s18, 1
      %s1067 = scalar_select %p1066, %s18, 1
      %p1068 = scmp.lt.s32.totalorder %s19, 0
      %s1069 = scalar_select %p1068, %s19, 0
      %s1070 = sadd.s32 %s1069, %s1067
      %s1071 = smul.addr %s1070, 4
      %s1072 = scalar_lea.vmem %s3, %s1071
      // Predicated region
      $region33: #{conv_block_forward.1} parent=31 // pred_check
        %p1073 = pneg %p119
      $region34: #{conv_block_forward.1} parent=31 // pred_check_branch
        %1075 = sbr.rel (%p1073) target = $region36
      $region35: #{conv_block_forward.1} parent=31 // pred_region
        _
      $region36: #{conv_block_forward.1} parent=31 // pred_fallthru
        _
    $region32: #{conv_block_forward.1} parent=5 // pred_fallthru
      _
    %p1076 = scmp.le.s32.totalorder 2, %s9
    // Predicated region
    $region37: #{conv_block_forward.1} parent=5 // pred_check
      %p1077 = pneg %p1076
    $region38: #{conv_block_forward.1} parent=5 // pred_check_branch
      %1079 = sbr.rel (%p1077) target = $region40
    $region39: #{conv_block_forward.1} parent=5 // pred_region
      %s1080 = ssub.s32 %s9, 2
      // Predicated region
      $region41: #{conv_block_forward.1} parent=39 // pred_check
        %p1081 = pneg %p125
      $region42: #{conv_block_forward.1} parent=39 // pred_check_branch
        %1083 = sbr.rel (%p1081) target = $region44
      $region43: #{conv_block_forward.1} parent=39 // pred_region
        %p1084 = scmp.lt.s32.totalorder %s20, 1
        %s1085 = scalar_select %p1084, %s20, 1
        %p1086 = scmp.lt.s32.totalorder %s21, 0
        %s1087 = scalar_select %p1086, %s21, 0
        %s1088 = sadd.s32 %s1087, %s1085
        %s1089 = smul.addr %s1088, 4
        %s1090 = scalar_lea.vmem %s3, %s1089
      $region44: #{conv_block_forward.1} parent=39 // pred_fallthru
        _
    $region40: #{conv_block_forward.1} parent=5 // pred_fallthru
      _
  $region6: #{conv_block_forward.1} parent=0 // loop_footer
    %s13 = sadd.s32 1, %s9
  $region7: #{conv_block_forward.1} parent=0 // loop_footer_branch
    %8 = sbr.rel target = $region3
  $region8: #{conv_block_forward.1} parent=0 // loop_exit
    _

</llo_original>
